<compile_context>
chip_gen: v6e
topology: v6e:2x2x1
jax: 0.10.0
libtpu: 0.0.40
codegen_flags: <defaults>
</compile_context>

<pallas_src>
import functools

import jax
import jax.numpy as jnp
from jax.experimental import pallas as pl
from jax.experimental.pallas import tpu as pltpu

BN_EPS = 1e-5
LANES = 128


def _round_up(x, m):
    return (x + m - 1) // m * m


def _pick_cout_tile(cout):
    # Largest multiple-of-8 divisor of Cout that still gives >= 2 grid steps
    # (so the "parallel" axis can be split across both v7x TensorCores),
    # capped at 256 to bound the per-step VMEM footprint.
    best = 0
    for t in range(8, min(cout // 2, 256) + 1, 8):
        if cout % t == 0:
            best = t
    return best if best else cout


def _convblock_kernel(x_ref, w_ref, gb_ref, o_ref, *, n_batch, lp, l_valid):
    """Fused Conv1d + train-mode BatchNorm1d + ReLU for one Cout tile.

    x_ref:  (Cin, N*Lp + 128)  channel-major input; sample n's conv-padded signal
                               occupies lanes [n*Lp, n*Lp + L + 2*pad), rest zero.
    w_ref:  (K, Ct, Cin)       conv weight, tap-major.
    gb_ref: (Ct, 2)            BN gamma / beta.
    o_ref:  (N, Ct, Lp)        lane-dense output tile (valid lanes: [0, l_valid)).
    """
    ksize = w_ref.shape[0]
    width = n_batch * lp

    x2 = x_ref[...]                                   # (Cin, width + 128)

    # ---- Conv1d: in-kernel im2col.  K accumulated MXU matmuls over the full
    #      N*Lp lane width (no per-sample batching, no weight broadcast).
    #      Valid output lanes never cross a sample boundary because
    #      l_valid + K - 1 <= Lp by construction. ----
    acc = jnp.dot(w_ref[0], x2[:, 0:width], preferred_element_type=jnp.float32)
    for k in range(1, ksize):                         # K is small and static
        xk = x2[:, k:k + width]                       # static lane-shifted view
        acc = acc + jnp.dot(w_ref[k], xk, preferred_element_type=jnp.float32)
    # NOTE: conv bias intentionally omitted — cancelled by the BN mean subtraction.

    # ---- BatchNorm1d (training mode): per-channel stats over the valid lanes.
    #      Mask = one (1, Lp) iota row, tiled per sample; a single full-width
    #      multiply both zeroes the padding lanes and feeds the sum-of-squares. ----
    if l_valid < lp:
        lane = jax.lax.broadcasted_iota(jnp.int32, (1, lp), 1)
        mrow = (lane < l_valid).astype(jnp.float32)                  # (1, Lp)
        mask = mrow if n_batch == 1 else jnp.concatenate([mrow] * n_batch, axis=1)
        am = acc * mask
    else:                                             # only possible when K == 1
        am = acc
    inv_cnt = 1.0 / float(n_batch * l_valid)
    s = jnp.sum(am, axis=1, keepdims=True)            # (Ct, 1)
    ss = jnp.sum(am * am, axis=1, keepdims=True)      # (Ct, 1)
    mean = s * inv_cnt
    # One-pass variance can cancel slightly below zero in f32 -> clamp before rsqrt.
    var = jnp.maximum(ss * inv_cnt - mean * mean, 0.0)
    inv = jax.lax.rsqrt(var + BN_EPS)                 # EUP rsqrt (free slot)

    gb = gb_ref[...]                                  # (Ct, 2)
    scale = gb[:, 0:1] * inv
    shift = gb[:, 1:2] - mean * scale

    # ---- normalize + affine + ReLU, lane-dense per-sample stores ----
    y = jnp.maximum(acc * scale + shift, 0.0)
    for i in range(n_batch):                          # 128-aligned value slices
        o_ref[i] = y[:, i * lp:(i + 1) * lp].astype(o_ref.dtype)


def conv_block_forward(x_ncl, weight, bias, gamma, beta, *, compute_dtype=jnp.bfloat16):
    """x_ncl: (N, Cin, L); weight: (Cout, Cin, K); bias/gamma/beta: (Cout,).

    `bias` is accepted to mirror the PyTorch module but is NOT used: train-mode
    BatchNorm subtracts the batch mean, which cancels any per-channel additive
    bias exactly.
    """
    del bias
    n, cin, length = x_ncl.shape
    cout, _, ksize = weight.shape
    assert ksize <= LANES
    pad = ksize // 2
    l_out = length + 2 * pad - ksize + 1
    lp = _round_up(length + 2 * pad, LANES)           # per-sample lane stride
    width = n * lp
    win = width + LANES                               # slack so shifted views stay in-bounds

    # Input layout plumbing (one fused XLA copy, no K-fold duplication):
    # (N, Cin, L) -> channel-major (Cin, N*Lp) with each sample's conv-padded
    # signal at a 128-aligned lane offset; matmul operands cast to bf16.
    xc = jnp.transpose(x_ncl, (1, 0, 2)).astype(compute_dtype)        # (Cin, N, L)
    xc = jnp.pad(xc, ((0, 0), (0, 0), (pad, lp - length - pad)))      # (Cin, N, Lp)
    x2 = jnp.pad(xc.reshape(cin, width), ((0, 0), (0, LANES)))        # (Cin, width+128)

    # Weight packed tap-major so tap k is a single first-axis index in-kernel.
    w3 = jnp.transpose(weight, (2, 0, 1)).astype(compute_dtype)       # (K, Cout, Cin)
    # gamma/beta consolidated into one tiny input (one DMA instead of two).
    gb = jnp.stack([gamma.astype(jnp.float32), beta.astype(jnp.float32)], axis=1)

    cout_tile = _pick_cout_tile(cout)
    grid = (cout // cout_tile,)

    # VMEM budget from the actual block sizes, capped per device generation.
    try:
        vmem_cap = int(pltpu.get_tpu_info().vmem_capacity_bytes)
    except Exception:
        vmem_cap = 64 * 1024 * 1024
    isz = jnp.dtype(compute_dtype).itemsize
    est = (cin * win * isz                            # x block (single-buffered)
           + 2 * ksize * cout_tile * cin * isz        # weight block (double-buffered)
           + 2 * cout_tile * 2 * 4                    # gamma/beta block
           + 2 * n * cout_tile * lp * 4               # output block (double-buffered)
           + 3 * cout_tile * width * 4                # f32 acc / masked / y working set
           + 2 * cin * width * isz)                   # shifted input views
    vmem_limit = int(min(0.9 * vmem_cap, max(32 * 2 ** 20, 2 * est)))

    kernel = functools.partial(_convblock_kernel, n_batch=n, lp=lp, l_valid=l_out)

    def _run(x_pipeline_mode):
        if x_pipeline_mode is None:
            x_spec = pl.BlockSpec((cin, win), lambda j: (0, 0))
        else:
            x_spec = pl.BlockSpec((cin, win), lambda j: (0, 0),
                                  pipeline_mode=x_pipeline_mode)
        return pl.pallas_call(
            kernel,
            out_shape=jax.ShapeDtypeStruct((n, cout, lp), jnp.float32),
            grid=grid,
            in_specs=[
                x_spec,
                pl.BlockSpec((ksize, cout_tile, cin), lambda j: (0, j, 0)),
                pl.BlockSpec((cout_tile, 2), lambda j: (j, 0)),
            ],
            out_specs=pl.BlockSpec((n, cout_tile, lp), lambda j: (0, j, 0)),
            compiler_params=pltpu.CompilerParams(
                dimension_semantics=("parallel",),
                vmem_limit_bytes=vmem_limit,
            ),
        )(x2, w3, gb)

    try:
        # The x block's index_map is constant across the grid -> single-buffer it.
        out = _run(pl.Buffered(1))
    except Exception:
        # pipeline_mode / Buffered(1) unsupported on this JAX: default buffering.
        out = _run(None)

    # TODO(synk): return the lane-padded (N, Cout, Lp) buffer (or fuse this slice
    # into the consumer) to avoid the extra output round-trip when L % 128 != 0.
    return out if l_out == lp else out[:, :, :l_out]


def _reference(x_ncl, weight, bias, gamma, beta):
    """Pure-JAX reference matching PyTorch Conv1d + BatchNorm1d(train) + ReLU."""
    ksize = weight.shape[-1]
    pad = ksize // 2
    y = jax.lax.conv_general_dilated(
        x_ncl, weight, window_strides=(1,), padding=[(pad, pad)],
        dimension_numbers=("NCH", "OIH", "NCH"))
    y = y + bias[None, :, None]
    mean = jnp.mean(y, axis=(0, 2), keepdims=True)
    var = jnp.mean((y - mean) ** 2, axis=(0, 2), keepdims=True)
    y = (y - mean) * jax.lax.rsqrt(var + BN_EPS)
    y = y * gamma[None, :, None] + beta[None, :, None]
    return jnp.maximum(y, 0.0)


if __name__ == "__main__":
    # Small shapes consistent with the module: batch=2, Cin=4, Cout=8, L=16, K=3.
    N, CIN, COUT, L, K = 2, 4, 8, 16, 3

    key = jax.random.PRNGKey(0)
    kx, kw, kb = jax.random.split(key, 3)

    x = jax.random.normal(kx, (N, CIN, L), dtype=jnp.float32)

    # Deterministic PyTorch-style init: U(-bound, bound) with bound = 1/sqrt(Cin*K).
    bound = 1.0 / jnp.sqrt(jnp.float32(CIN * K))
    weight = jax.random.uniform(kw, (COUT, CIN, K), jnp.float32, -bound, bound)
    bias = jax.random.uniform(kb, (COUT,), jnp.float32, -bound, bound)
    gamma = jnp.ones((COUT,), jnp.float32)   # BatchNorm1d default affine init
    beta = jnp.zeros((COUT,), jnp.float32)

    out = jax.block_until_ready(conv_block_forward(x, weight, bias, gamma, beta))

    # Apples-to-apples reference: same bf16 rounding of the matmul operands
    # (the kernel accumulates in f32; BN renormalization keeps the deviation tiny).
    x_r = x.astype(jnp.bfloat16).astype(jnp.float32)
    w_r = weight.astype(jnp.bfloat16).astype(jnp.float32)
    ref = _reference(x_r, w_r, bias, gamma, beta)

    assert out.shape == (N, COUT, L), out.shape
    max_err = float(jnp.max(jnp.abs(out - ref)))
    assert jnp.allclose(out, ref, atol=1e-3, rtol=1e-3), max_err

    print("KERNEL_OK")
</pallas_src>

<mosaic_0001>
module attributes {stable_mosaic.version = 11 : i64} {
  func.func @_convblock_kernel(%arg0: i32, %arg1: memref<4x384xbf16, #tpu.memory_space<vmem>>, %arg2: memref<3x8x4xbf16, #tpu.memory_space<vmem>>, %arg3: memref<8x2xf32, #tpu.memory_space<vmem>>, %arg4: memref<2x8x128xf32, #tpu.memory_space<vmem>>) attributes {dimension_semantics = [#tpu.dimension_semantics<parallel>], iteration_bounds = array<i64: 1>, scalar_prefetch = 0 : i64, scratch_operands = 0 : i64, tpu.core_type = #tpu.core_type<tc>, window_params = [{pipeline_mode = #tpu.pipeline_mode<synchronous>, transform_indices = @transform_0, window_bounds = array<i64: 4, 384>}, {transform_indices = @transform_1, window_bounds = array<i64: 3, 8, 4>}, {transform_indices = @transform_2, window_bounds = array<i64: 8, 2>}, {transform_indices = @transform_3, window_bounds = array<i64: 2, 8, 128>}]} {
    %c0 = arith.constant 0 : index
    %c0_0 = arith.constant 0 : index
    %0 = vector.load %arg1[%c0, %c0_0] : memref<4x384xbf16, #tpu.memory_space<vmem>>, vector<4x384xbf16>
    %c0_1 = arith.constant 0 : index
    %c0_2 = arith.constant 0 : index
    %c0_3 = arith.constant 0 : index
    %1 = vector.load %arg2[%c0_1, %c0_2, %c0_3] : memref<3x8x4xbf16, #tpu.memory_space<vmem>>, vector<1x8x4xbf16>
    %2 = vector.shape_cast %1 : vector<1x8x4xbf16> to vector<8x4xbf16>
    %3 = vector.extract_strided_slice %0 {offsets = [0, 0], sizes = [4, 256], strides = [1, 1]} : vector<4x384xbf16> to vector<4x256xbf16>
    %cst = arith.constant dense<0.000000e+00> : vector<8x256xf32>
    %4 = tpu.matmul %2, %3, %cst {dimension_numbers = #tpu.dot_dimension_numbers<[1], [0], [0], [1], [0, 0, 1, 1], [], []>} : vector<8x4xbf16>, vector<4x256xbf16>, vector<8x256xf32> -> vector<8x256xf32>
    %5 = vector.extract_strided_slice %0 {offsets = [0, 1], sizes = [4, 256], strides = [1, 1]} : vector<4x384xbf16> to vector<4x256xbf16>
    %c1 = arith.constant 1 : index
    %c0_4 = arith.constant 0 : index
    %c0_5 = arith.constant 0 : index
    %6 = vector.load %arg2[%c1, %c0_4, %c0_5] : memref<3x8x4xbf16, #tpu.memory_space<vmem>>, vector<1x8x4xbf16>
    %7 = vector.shape_cast %6 : vector<1x8x4xbf16> to vector<8x4xbf16>
    %cst_6 = arith.constant dense<0.000000e+00> : vector<8x256xf32>
    %8 = tpu.matmul %7, %5, %cst_6 {dimension_numbers = #tpu.dot_dimension_numbers<[1], [0], [0], [1], [0, 0, 1, 1], [], []>} : vector<8x4xbf16>, vector<4x256xbf16>, vector<8x256xf32> -> vector<8x256xf32>
    %9 = arith.addf %4, %8 : vector<8x256xf32>
    %10 = vector.extract_strided_slice %0 {offsets = [0, 2], sizes = [4, 256], strides = [1, 1]} : vector<4x384xbf16> to vector<4x256xbf16>
    %c2 = arith.constant 2 : index
    %c0_7 = arith.constant 0 : index
    %c0_8 = arith.constant 0 : index
    %11 = vector.load %arg2[%c2, %c0_7, %c0_8] : memref<3x8x4xbf16, #tpu.memory_space<vmem>>, vector<1x8x4xbf16>
    %12 = vector.shape_cast %11 : vector<1x8x4xbf16> to vector<8x4xbf16>
    %cst_9 = arith.constant dense<0.000000e+00> : vector<8x256xf32>
    %13 = tpu.matmul %12, %10, %cst_9 {dimension_numbers = #tpu.dot_dimension_numbers<[1], [0], [0], [1], [0, 0, 1, 1], [], []>} : vector<8x4xbf16>, vector<4x256xbf16>, vector<8x256xf32> -> vector<8x256xf32>
    %14 = arith.addf %9, %13 : vector<8x256xf32>
    %15 = tpu.iota {dimensions = array<i32: 1>} : vector<1x128xi32>
    %c16_i32 = arith.constant 16 : i32
    %16 = vector.broadcast %c16_i32 : i32 to vector<1x128xi32>
    %17 = arith.cmpi slt, %15, %16 : vector<1x128xi32>
    %18 = arith.extui %17 : vector<1x128xi1> to vector<1x128xi32>
    %19 = arith.sitofp %18 : vector<1x128xi32> to vector<1x128xf32>
    %20 = tpu.concatenate %19, %19 in 1 : vector<1x128xf32>, vector<1x128xf32> -> vector<1x256xf32>
    %21 = vector.broadcast %20 : vector<1x256xf32> to vector<8x256xf32>
    %22 = arith.mulf %14, %21 : vector<8x256xf32>
    %cst_10 = arith.constant dense<0.000000e+00> : vector<8xf32>
    %23 = vector.multi_reduction <add>, %22, %cst_10 [1] : vector<8x256xf32> to vector<8xf32>
    %24 = vector.shape_cast %23 : vector<8xf32> to vector<8x1xf32>
    %25 = arith.mulf %22, %22 : vector<8x256xf32>
    %cst_11 = arith.constant dense<0.000000e+00> : vector<8xf32>
    %26 = vector.multi_reduction <add>, %25, %cst_11 [1] : vector<8x256xf32> to vector<8xf32>
    %27 = vector.shape_cast %26 : vector<8xf32> to vector<8x1xf32>
    %cst_12 = arith.constant 3.125000e-02 : f32
    %28 = vector.broadcast %cst_12 : f32 to vector<8x1xf32>
    %29 = arith.mulf %24, %28 : vector<8x1xf32>
    %cst_13 = arith.constant 3.125000e-02 : f32
    %30 = vector.broadcast %cst_13 : f32 to vector<8x1xf32>
    %31 = arith.mulf %27, %30 : vector<8x1xf32>
    %32 = arith.mulf %29, %29 : vector<8x1xf32>
    %33 = arith.subf %31, %32 : vector<8x1xf32>
    %cst_14 = arith.constant 0.000000e+00 : f32
    %34 = vector.broadcast %cst_14 : f32 to vector<8x1xf32>
    %35 = arith.maximumf %33, %34 : vector<8x1xf32>
    %cst_15 = arith.constant 9.99999974E-6 : f32
    %36 = vector.broadcast %cst_15 : f32 to vector<8x1xf32>
    %37 = arith.addf %35, %36 : vector<8x1xf32>
    %38 = math.rsqrt %37 : vector<8x1xf32>
    %c0_16 = arith.constant 0 : index
    %c0_17 = arith.constant 0 : index
    %39 = vector.load %arg3[%c0_16, %c0_17] : memref<8x2xf32, #tpu.memory_space<vmem>>, vector<8x2xf32>
    %40 = vector.extract_strided_slice %39 {offsets = [0, 0], sizes = [8, 1], strides = [1, 1]} : vector<8x2xf32> to vector<8x1xf32>
    %41 = arith.mulf %40, %38 : vector<8x1xf32>
    %42 = vector.extract_strided_slice %39 {offsets = [0, 1], sizes = [8, 1], strides = [1, 1]} : vector<8x2xf32> to vector<8x1xf32>
    %43 = arith.mulf %29, %41 : vector<8x1xf32>
    %44 = arith.subf %42, %43 : vector<8x1xf32>
    %45 = vector.broadcast %41 : vector<8x1xf32> to vector<8x256xf32>
    %46 = arith.mulf %14, %45 : vector<8x256xf32>
    %47 = vector.broadcast %44 : vector<8x1xf32> to vector<8x256xf32>
    %48 = arith.addf %46, %47 : vector<8x256xf32>
    %cst_18 = arith.constant 0.000000e+00 : f32
    %49 = vector.broadcast %cst_18 : f32 to vector<8x256xf32>
    %50 = arith.maximumf %48, %49 : vector<8x256xf32>
    %51 = vector.extract_strided_slice %50 {offsets = [0, 0], sizes = [8, 128], strides = [1, 1]} : vector<8x256xf32> to vector<8x128xf32>
    %c0_19 = arith.constant 0 : index
    %c0_20 = arith.constant 0 : index
    %c0_21 = arith.constant 0 : index
    %52 = vector.load %arg4[%c0_19, %c0_20, %c0_21] : memref<2x8x128xf32, #tpu.memory_space<vmem>>, vector<1x8x128xf32>
    %53 = vector.shape_cast %52 : vector<1x8x128xf32> to vector<8x128xf32>
    %54 = vector.shape_cast %51 : vector<8x128xf32> to vector<1x8x128xf32>
    tpu.vector_store %arg4[%c0_19, %c0_20, %c0_21], %54 {strides = array<i32>} : memref<2x8x128xf32, #tpu.memory_space<vmem>>, vector<1x8x128xf32>,
    %55 = vector.extract_strided_slice %50 {offsets = [0, 128], sizes = [8, 128], strides = [1, 1]} : vector<8x256xf32> to vector<8x128xf32>
    %c1_22 = arith.constant 1 : index
    %c0_23 = arith.constant 0 : index
    %c0_24 = arith.constant 0 : index
    %56 = vector.load %arg4[%c1_22, %c0_23, %c0_24] : memref<2x8x128xf32, #tpu.memory_space<vmem>>, vector<1x8x128xf32>
    %57 = vector.shape_cast %56 : vector<1x8x128xf32> to vector<8x128xf32>
    %58 = vector.shape_cast %55 : vector<8x128xf32> to vector<1x8x128xf32>
    tpu.vector_store %arg4[%c1_22, %c0_23, %c0_24], %58 {strides = array<i32>} : memref<2x8x128xf32, #tpu.memory_space<vmem>>, vector<1x8x128xf32>,
    return
  }
  func.func @transform_0(%arg0: i32) -> (i32, i32) {
    %c0_i32 = arith.constant 0 : i32
    %c0_i32_0 = arith.constant 0 : i32
    %c0_i32_1 = arith.constant 0 : i32
    return %c0_i32, %c0_i32_0 : i32, i32
  }
  func.func @transform_1(%arg0: i32) -> (i32, i32, i32) {
    %c0_i32 = arith.constant 0 : i32
    %c0_i32_0 = arith.constant 0 : i32
    %c0_i32_1 = arith.constant 0 : i32
    return %c0_i32, %arg0, %c0_i32_0 : i32, i32, i32
  }
  func.func @transform_2(%arg0: i32) -> (i32, i32) {
    %c0_i32 = arith.constant 0 : i32
    %c0_i32_0 = arith.constant 0 : i32
    return %arg0, %c0_i32 : i32, i32
  }
  func.func @transform_3(%arg0: i32) -> (i32, i32, i32) {
    %c0_i32 = arith.constant 0 : i32
    %c0_i32_0 = arith.constant 0 : i32
    %c0_i32_1 = arith.constant 0 : i32
    return %c0_i32, %arg0, %c0_i32_0 : i32, i32, i32
  }
}

module attributes {stable_mosaic.version = 11 : i64} {
  func.func @_convblock_kernel(%arg0: i32, %arg1: memref<4x384xbf16, #tpu.memory_space<vmem>>, %arg2: memref<3x8x4xbf16, #tpu.memory_space<vmem>>, %arg3: memref<8x2xf32, #tpu.memory_space<vmem>>, %arg4: memref<2x8x128xf32, #tpu.memory_space<vmem>>) attributes {dimension_semantics = [#tpu.dimension_semantics<parallel>], iteration_bounds = array<i64: 1>, scalar_prefetch = 0 : i64, scratch_operands = 0 : i64, tpu.core_type = #tpu.core_type<tc>, window_params = [{pipeline_mode = #tpu.pipeline_mode<synchronous>, transform_indices = @transform_0, window_bounds = array<i64: 4, 384>}, {transform_indices = @transform_1, window_bounds = array<i64: 3, 8, 4>}, {transform_indices = @transform_2, window_bounds = array<i64: 8, 2>}, {transform_indices = @transform_3, window_bounds = array<i64: 2, 8, 128>}]} {
    %c0 = arith.constant 0 : index
    %c0_0 = arith.constant 0 : index
    %0 = vector.load %arg1[%c0, %c0_0] : memref<4x384xbf16, #tpu.memory_space<vmem>>, vector<4x384xbf16>
    %c0_1 = arith.constant 0 : index
    %c0_2 = arith.constant 0 : index
    %c0_3 = arith.constant 0 : index
    %1 = vector.load %arg2[%c0_1, %c0_2, %c0_3] : memref<3x8x4xbf16, #tpu.memory_space<vmem>>, vector<1x8x4xbf16>
    %2 = vector.shape_cast %1 : vector<1x8x4xbf16> to vector<8x4xbf16>
    %3 = vector.extract_strided_slice %0 {offsets = [0, 0], sizes = [4, 256], strides = [1, 1]} : vector<4x384xbf16> to vector<4x256xbf16>
    %cst = arith.constant dense<0.000000e+00> : vector<8x256xf32>
    %4 = tpu.matmul %2, %3, %cst {dimension_numbers = #tpu.dot_dimension_numbers<[1], [0], [0], [1], [0, 0, 1, 1], [], []>} : vector<8x4xbf16>, vector<4x256xbf16>, vector<8x256xf32> -> vector<8x256xf32>
    %5 = vector.extract_strided_slice %0 {offsets = [0, 1], sizes = [4, 256], strides = [1, 1]} : vector<4x384xbf16> to vector<4x256xbf16>
    %c1 = arith.constant 1 : index
    %c0_4 = arith.constant 0 : index
    %c0_5 = arith.constant 0 : index
    %6 = vector.load %arg2[%c1, %c0_4, %c0_5] : memref<3x8x4xbf16, #tpu.memory_space<vmem>>, vector<1x8x4xbf16>
    %7 = vector.shape_cast %6 : vector<1x8x4xbf16> to vector<8x4xbf16>
    %cst_6 = arith.constant dense<0.000000e+00> : vector<8x256xf32>
    %8 = tpu.matmul %7, %5, %cst_6 {dimension_numbers = #tpu.dot_dimension_numbers<[1], [0], [0], [1], [0, 0, 1, 1], [], []>} : vector<8x4xbf16>, vector<4x256xbf16>, vector<8x256xf32> -> vector<8x256xf32>
    %9 = arith.addf %4, %8 : vector<8x256xf32>
    %10 = vector.extract_strided_slice %0 {offsets = [0, 2], sizes = [4, 256], strides = [1, 1]} : vector<4x384xbf16> to vector<4x256xbf16>
    %c2 = arith.constant 2 : index
    %c0_7 = arith.constant 0 : index
    %c0_8 = arith.constant 0 : index
    %11 = vector.load %arg2[%c2, %c0_7, %c0_8] : memref<3x8x4xbf16, #tpu.memory_space<vmem>>, vector<1x8x4xbf16>
    %12 = vector.shape_cast %11 : vector<1x8x4xbf16> to vector<8x4xbf16>
    %cst_9 = arith.constant dense<0.000000e+00> : vector<8x256xf32>
    %13 = tpu.matmul %12, %10, %cst_9 {dimension_numbers = #tpu.dot_dimension_numbers<[1], [0], [0], [1], [0, 0, 1, 1], [], []>} : vector<8x4xbf16>, vector<4x256xbf16>, vector<8x256xf32> -> vector<8x256xf32>
    %14 = arith.addf %9, %13 : vector<8x256xf32>
    %15 = tpu.iota {dimensions = array<i32: 1>} : vector<1x128xi32>
    %c16_i32 = arith.constant 16 : i32
    %16 = vector.broadcast %c16_i32 : i32 to vector<1x128xi32>
    %17 = arith.cmpi slt, %15, %16 : vector<1x128xi32>
    %18 = arith.extui %17 : vector<1x128xi1> to vector<1x128xi32>
    %19 = arith.sitofp %18 : vector<1x128xi32> to vector<1x128xf32>
    %20 = tpu.concatenate %19, %19 in 1 : vector<1x128xf32>, vector<1x128xf32> -> vector<1x256xf32>
    %21 = vector.broadcast %20 : vector<1x256xf32> to vector<8x256xf32>
    %22 = arith.mulf %14, %21 : vector<8x256xf32>
    %cst_10 = arith.constant dense<0.000000e+00> : vector<8xf32>
    %23 = vector.multi_reduction <add>, %22, %cst_10 [1] : vector<8x256xf32> to vector<8xf32>
    %24 = vector.shape_cast %23 : vector<8xf32> to vector<8x1xf32>
    %25 = arith.mulf %22, %22 : vector<8x256xf32>
    %cst_11 = arith.constant dense<0.000000e+00> : vector<8xf32>
    %26 = vector.multi_reduction <add>, %25, %cst_11 [1] : vector<8x256xf32> to vector<8xf32>
    %27 = vector.shape_cast %26 : vector<8xf32> to vector<8x1xf32>
    %cst_12 = arith.constant 3.125000e-02 : f32
    %28 = vector.broadcast %cst_12 : f32 to vector<8x1xf32>
    %29 = arith.mulf %24, %28 : vector<8x1xf32>
    %cst_13 = arith.constant 3.125000e-02 : f32
    %30 = vector.broadcast %cst_13 : f32 to vector<8x1xf32>
    %31 = arith.mulf %27, %30 : vector<8x1xf32>
    %32 = arith.mulf %29, %29 : vector<8x1xf32>
    %33 = arith.subf %31, %32 : vector<8x1xf32>
    %cst_14 = arith.constant 0.000000e+00 : f32
    %34 = vector.broadcast %cst_14 : f32 to vector<8x1xf32>
    %35 = arith.maximumf %33, %34 : vector<8x1xf32>
    %cst_15 = arith.constant 9.99999974E-6 : f32
    %36 = vector.broadcast %cst_15 : f32 to vector<8x1xf32>
    %37 = arith.addf %35, %36 : vector<8x1xf32>
    %38 = math.rsqrt %37 : vector<8x1xf32>
    %c0_16 = arith.constant 0 : index
    %c0_17 = arith.constant 0 : index
    %39 = vector.load %arg3[%c0_16, %c0_17] : memref<8x2xf32, #tpu.memory_space<vmem>>, vector<8x2xf32>
    %40 = vector.extract_strided_slice %39 {offsets = [0, 0], sizes = [8, 1], strides = [1, 1]} : vector<8x2xf32> to vector<8x1xf32>
    %41 = arith.mulf %40, %38 : vector<8x1xf32>
    %42 = vector.extract_strided_slice %39 {offsets = [0, 1], sizes = [8, 1], strides = [1, 1]} : vector<8x2xf32> to vector<8x1xf32>
    %43 = arith.mulf %29, %41 : vector<8x1xf32>
    %44 = arith.subf %42, %43 : vector<8x1xf32>
    %45 = vector.broadcast %41 : vector<8x1xf32> to vector<8x256xf32>
    %46 = arith.mulf %14, %45 : vector<8x256xf32>
    %47 = vector.broadcast %44 : vector<8x1xf32> to vector<8x256xf32>
    %48 = arith.addf %46, %47 : vector<8x256xf32>
    %cst_18 = arith.constant 0.000000e+00 : f32
    %49 = vector.broadcast %cst_18 : f32 to vector<8x256xf32>
    %50 = arith.maximumf %48, %49 : vector<8x256xf32>
    %51 = vector.extract_strided_slice %50 {offsets = [0, 0], sizes = [8, 128], strides = [1, 1]} : vector<8x256xf32> to vector<8x128xf32>
    %c0_19 = arith.constant 0 : index
    %c0_20 = arith.constant 0 : index
    %c0_21 = arith.constant 0 : index
    %52 = vector.load %arg4[%c0_19, %c0_20, %c0_21] : memref<2x8x128xf32, #tpu.memory_space<vmem>>, vector<1x8x128xf32>
    %53 = vector.shape_cast %52 : vector<1x8x128xf32> to vector<8x128xf32>
    %54 = vector.shape_cast %51 : vector<8x128xf32> to vector<1x8x128xf32>
    tpu.vector_store %arg4[%c0_19, %c0_20, %c0_21], %54 {strides = array<i32>} : memref<2x8x128xf32, #tpu.memory_space<vmem>>, vector<1x8x128xf32>,
    %55 = vector.extract_strided_slice %50 {offsets = [0, 128], sizes = [8, 128], strides = [1, 1]} : vector<8x256xf32> to vector<8x128xf32>
    %c1_22 = arith.constant 1 : index
    %c0_23 = arith.constant 0 : index
    %c0_24 = arith.constant 0 : index
    %56 = vector.load %arg4[%c1_22, %c0_23, %c0_24] : memref<2x8x128xf32, #tpu.memory_space<vmem>>, vector<1x8x128xf32>
    %57 = vector.shape_cast %56 : vector<1x8x128xf32> to vector<8x128xf32>
    %58 = vector.shape_cast %55 : vector<8x128xf32> to vector<1x8x128xf32>
    tpu.vector_store %arg4[%c1_22, %c0_23, %c0_24], %58 {strides = array<i32>} : memref<2x8x128xf32, #tpu.memory_space<vmem>>, vector<1x8x128xf32>,
    return
  }
  func.func @transform_0(%arg0: i32) -> (i32, i32) {
    %c0_i32 = arith.constant 0 : i32
    %c0_i32_0 = arith.constant 0 : i32
    %c0_i32_1 = arith.constant 0 : i32
    return %c0_i32, %c0_i32_0 : i32, i32
  }
  func.func @transform_1(%arg0: i32) -> (i32, i32, i32) {
    %c0_i32 = arith.constant 0 : i32
    %c0_i32_0 = arith.constant 0 : i32
    %c0_i32_1 = arith.constant 0 : i32
    return %c0_i32, %arg0, %c0_i32_0 : i32, i32, i32
  }
  func.func @transform_2(%arg0: i32) -> (i32, i32) {
    %c0_i32 = arith.constant 0 : i32
    %c0_i32_0 = arith.constant 0 : i32
    return %arg0, %c0_i32 : i32, i32
  }
  func.func @transform_3(%arg0: i32) -> (i32, i32, i32) {
    %c0_i32 = arith.constant 0 : i32
    %c0_i32_0 = arith.constant 0 : i32
    %c0_i32_1 = arith.constant 0 : i32
    return %c0_i32, %arg0, %c0_i32_0 : i32, i32, i32
  }
}

</mosaic_0001>

<llo_original>
// kernel: tpu_custom_call.1
$region0: #{tpu_custom_call.1}
  #allocation0 [shape = 'u32[]', space=smem, size = 0x4, offset = 0x4, fixed_abs, tag = 'smem constant byte address 0x4 - core index']
  #allocation1 [shape = 'u32[144,128]{1,0:T(1,128)}', space=vmem, size = 0x12000, scoped, tag = 'internal scratch']
  %s0 = inlined_call_operand.vmem [shape: bf16[4,384], index: 0, kind: input, shape index: {}]
  %s1 = inlined_call_operand.vmem [shape: bf16[3,8,4], index: 1, kind: input, shape index: {}]
  %s2 = inlined_call_operand.vmem [shape: f32[8,2], index: 2, kind: input, shape index: {}]
  %s3 = inlined_call_operand.hbm [shape: f32[2,8,128], index: 3, kind: output, shape index: {}]
  %s4 = sld [smem:[#allocation0]]
  $region22: #{tpu_custom_call.1} parent=0
    _
  %s6 = ssub.s32 1, %s4
  %s7 = scalar_select 0, %s6, %s4
  $region1: #{tpu_custom_call.1} parent=0
    #allocation2 [shape = 'u8[8192]{0}', space=vmem, size = 0x2000, scoped, tag = 'output window, operand 0, single buffered']
    #allocation3 [shape = 's32[1]{0}', space=sflag, size = 0x4, scoped, tag = 'scoped memory for tpu_custom_call.1']
    %8 = vsyncpa [#allocation3], 0
    // Predicated region
    $region2: #{tpu_custom_call.1} parent=1 // pred_check
      _
    $region3: #{tpu_custom_call.1} parent=1 // pred_check_branch
      %10 = sbr.rel (0) target = $region5
    $region4: #{tpu_custom_call.1} parent=1 // pred_region
      _
    $region5: #{tpu_custom_call.1} parent=1 // pred_fallthru
      _
    // Predicated region
    $region6: #{tpu_custom_call.1} parent=1 // pred_check
      _
    $region7: #{tpu_custom_call.1} parent=1 // pred_check_branch
      %12 = sbr.rel (0) target = $region9
    $region8: #{tpu_custom_call.1} parent=1 // pred_region
      _
    $region9: #{tpu_custom_call.1} parent=1 // pred_fallthru
      _
    // Predicated region
    $region10: #{tpu_custom_call.1} parent=1 // pred_check
      _
    $region11: #{tpu_custom_call.1} parent=1 // pred_check_branch
      %14 = sbr.rel (0) target = $region13
    $region12: #{tpu_custom_call.1} parent=1 // pred_region
      _
    $region13: #{tpu_custom_call.1} parent=1 // pred_fallthru
      _
    %v16 = vld [vmem:[%s0] sm:$0x3f]
    %v17 = vld [vmem:[%s1] sm:$0xf]
    %s18 = scalar_lea.vmem %s1, 4
    %v19 = vld [vmem:[%s18] sm:$0xf]
    %v21 = vcombine.high %v16, %v16
    %v23 = vunpack.c.l.s4 1983009808
    %v24 = vunpack.c.0.s8 %v23
    %v25 = vlaneseq
    %v26 = vshrl.u32 %v25, 7
    %v27 = vsub.s32 %v24, %v26
    %v28 = vrot.slane %v16, %v27
    %v30 = vunpack.c.l.s4 1983009808
    %v31 = vunpack.c.0.s8 %v30
    %v32 = vlaneseq
    %v33 = vshrl.u32 %v32, 7
    %v34 = vsub.s32 %v31, %v33
    %v35 = vrot.slane %v21, %v34
    %v36 = vcombine.high %v28, %v28
    %37 = vrot.lane.b32.xlu0 %v28, 127
    %v38 = vpop.permute.xlu0 %37
    %39 = vrot.lane.b32.xlu0 %v36, 127
    %v40 = vpop.permute.xlu0 %39
    %41 = vrot.lane.b32.xlu0 %v35, 127
    %v42 = vpop.permute.xlu0 %41
    %vm43 = vcmask 1039360
    %v44 = vsel %vm43, %v38, %v40
    %v45 = vsel %vm43, %v40, %v42
    %vm46 = vcmask 31744
    %v48 = vsel %vm46, %v19, 0
    %vm50 = vcmask 1041408
    %v52 = vsel %vm50, %v44, 0
    %v55 = vsel %vm50, %v45, 0
    %57 = vmatprep.subr.bf16.mxu0 0
    %58 = vmatpush1.bf16.msra.mxu0 0
    %59 = vmatprep.subr.bf16.mxu0 0
    %60 = vmatpush1.bf16.msra.mxu0 0
    %61 = vmatprep.subr.bf16.mxu0 0
    %62 = vmatpush1.bf16.msra.mxu0 0
    %63 = vmatprep.subr.bf16.mxu0 0
    %64 = vmatpush1.bf16.msra.mxu0 0
    %65 = vmatprep.subr.bf16.mxu0 0
    %66 = vmatpush1.bf16.msra.mxu0 0
    %67 = vmatprep.subr.bf16.mxu0 0
    %68 = vmatpush1.bf16.msra.mxu0 0
    %69 = vmatprep.subr.bf16.mxu0 0
    %70 = vmatpush1.bf16.msra.mxu0 0
    %71 = vmatprep.subr.bf16.mxu0 %v55
    %72 = vmatpush1.bf16.msra.mxu0 %v52
    %73 = vmatprep.subr.bf16.mxu0 0
    %74 = vmatpush2.bf16.msra.mxu0 0
    %75 = vmatprep.subr.bf16.mxu0 0
    %76 = vmatpush2.bf16.msra.mxu0 0
    %77 = vmatprep.subr.bf16.mxu0 0
    %78 = vmatpush2.bf16.msra.mxu0 0
    %79 = vmatprep.subr.bf16.mxu0 0
    %80 = vmatpush2.bf16.msra.mxu0 0
    %81 = vmatprep.subr.bf16.mxu0 0
    %82 = vmatpush2.bf16.msra.mxu0 0
    %83 = vmatprep.subr.bf16.mxu0 0
    %84 = vmatpush2.bf16.msra.mxu0 0
    %85 = vmatprep.subr.bf16.mxu0 0
    %86 = vmatpush2.bf16.msra.mxu0 0
    %87 = vmatprep.subr.bf16.mxu0 0
    %88 = vmatpush2.bf16.msra.mxu0 0
    %89 = vmatprep.mubr.bf16.mxu0 0
    %90 = vmatmul.mubr.bf16.gmra.mxu0 %v48
    %v91 = vpop.f32.mrf.mxu0
    %v92 = vadd.f32 0.0, %v91
    %v93 = vpop.f32.mrf.mxu0
    %v94 = vadd.f32 0.0, %v93
    %v95 = vpop.f32.mrf.mxu0
    %v96 = vpop.f32.mrf.mxu0
    %97 = vdwg.mxu0
    %v99 = vsel %vm46, %v17, 0
    %v102 = vsel %vm50, %v28, 0
    %v105 = vsel %vm50, %v36, 0
    %107 = vmatprep.subr.bf16.mxu0 0
    %108 = vmatpush1.bf16.msra.mxu0 0
    %109 = vmatprep.subr.bf16.mxu0 0
    %110 = vmatpush1.bf16.msra.mxu0 0
    %111 = vmatprep.subr.bf16.mxu0 0
    %112 = vmatpush1.bf16.msra.mxu0 0
    %113 = vmatprep.subr.bf16.mxu0 0
    %114 = vmatpush1.bf16.msra.mxu0 0
    %115 = vmatprep.subr.bf16.mxu0 0
    %116 = vmatpush1.bf16.msra.mxu0 0
    %117 = vmatprep.subr.bf16.mxu0 0
    %118 = vmatpush1.bf16.msra.mxu0 0
    %119 = vmatprep.subr.bf16.mxu0 0
    %120 = vmatpush1.bf16.msra.mxu0 0
    %121 = vmatprep.subr.bf16.mxu0 %v105
    %122 = vmatpush1.bf16.msra.mxu0 %v102
    %123 = vmatprep.subr.bf16.mxu0 0
    %124 = vmatpush2.bf16.msra.mxu0 0
    %125 = vmatprep.subr.bf16.mxu0 0
    %126 = vmatpush2.bf16.msra.mxu0 0
    %127 = vmatprep.subr.bf16.mxu0 0
    %128 = vmatpush2.bf16.msra.mxu0 0
    %129 = vmatprep.subr.bf16.mxu0 0
    %130 = vmatpush2.bf16.msra.mxu0 0
    %131 = vmatprep.subr.bf16.mxu0 0
    %132 = vmatpush2.bf16.msra.mxu0 0
    %133 = vmatprep.subr.bf16.mxu0 0
    %134 = vmatpush2.bf16.msra.mxu0 0
    %135 = vmatprep.subr.bf16.mxu0 0
    %136 = vmatpush2.bf16.msra.mxu0 0
    %137 = vmatprep.subr.bf16.mxu0 0
    %138 = vmatpush2.bf16.msra.mxu0 0
    %139 = vmatprep.mubr.bf16.mxu0 0
    %140 = vmatmul.mubr.bf16.gmra.mxu0 %v99
    %v141 = vpop.f32.mrf.mxu0
    %v142 = vadd.f32 %v92, %v141
    %v143 = vpop.f32.mrf.mxu0
    %v144 = vadd.f32 %v94, %v143
    %v145 = vpop.f32.mrf.mxu0
    %v146 = vpop.f32.mrf.mxu0
    %147 = vdwg.mxu0
    %s148 = scalar_lea.vmem %s1, 8
    %v149 = vld [vmem:[%s148] sm:$0xf]
    %150 = vrot.lane.b32.xlu0 %v28, 126
    %v151 = vpop.permute.xlu0 %150
    %152 = vrot.lane.b32.xlu0 %v36, 126
    %v153 = vpop.permute.xlu0 %152
    %154 = vrot.lane.b32.xlu0 %v35, 126
    %v155 = vpop.permute.xlu0 %154
    %vm156 = vcmask 1031168
    %v157 = vsel %vm156, %v151, %v153
    %v158 = vsel %vm156, %v153, %v155
    %v160 = vsel %vm46, %v149, 0
    %v163 = vsel %vm50, %v157, 0
    %v166 = vsel %vm50, %v158, 0
    %168 = vmatprep.subr.bf16.mxu0 0
    %169 = vmatpush1.bf16.msra.mxu0 0
    %170 = vmatprep.subr.bf16.mxu0 0
    %171 = vmatpush1.bf16.msra.mxu0 0
    %172 = vmatprep.subr.bf16.mxu0 0
    %173 = vmatpush1.bf16.msra.mxu0 0
    %174 = vmatprep.subr.bf16.mxu0 0
    %175 = vmatpush1.bf16.msra.mxu0 0
    %176 = vmatprep.subr.bf16.mxu0 0
    %177 = vmatpush1.bf16.msra.mxu0 0
    %178 = vmatprep.subr.bf16.mxu0 0
    %179 = vmatpush1.bf16.msra.mxu0 0
    %180 = vmatprep.subr.bf16.mxu0 0
    %181 = vmatpush1.bf16.msra.mxu0 0
    %182 = vmatprep.subr.bf16.mxu0 %v166
    %183 = vmatpush1.bf16.msra.mxu0 %v163
    %184 = vmatprep.subr.bf16.mxu0 0
    %185 = vmatpush2.bf16.msra.mxu0 0
    %186 = vmatprep.subr.bf16.mxu0 0
    %187 = vmatpush2.bf16.msra.mxu0 0
    %188 = vmatprep.subr.bf16.mxu0 0
    %189 = vmatpush2.bf16.msra.mxu0 0
    %190 = vmatprep.subr.bf16.mxu0 0
    %191 = vmatpush2.bf16.msra.mxu0 0
    %192 = vmatprep.subr.bf16.mxu0 0
    %193 = vmatpush2.bf16.msra.mxu0 0
    %194 = vmatprep.subr.bf16.mxu0 0
    %195 = vmatpush2.bf16.msra.mxu0 0
    %196 = vmatprep.subr.bf16.mxu0 0
    %197 = vmatpush2.bf16.msra.mxu0 0
    %198 = vmatprep.subr.bf16.mxu0 0
    %199 = vmatpush2.bf16.msra.mxu0 0
    %200 = vmatprep.mubr.bf16.mxu0 0
    %201 = vmatmul.mubr.bf16.gmra.mxu0 %v160
    %v202 = vpop.f32.mrf.mxu0
    %v203 = vadd.f32 0.0, %v202
    %v204 = vpop.f32.mrf.mxu0
    %v205 = vadd.f32 0.0, %v204
    %v206 = vpop.f32.mrf.mxu0
    %v207 = vpop.f32.mrf.mxu0
    %208 = vdwg.mxu0
    %v209 = vadd.f32 %v142, %v203
    %v210 = vadd.f32 %v144, %v205
    %v211 = vlaneseq
    %v212 = vand.u32 %v211, 127
    %vm213 = vcmp.lt.s32.totalorder %v212, 16
    %v214 = vsel %vm213, 1, 0
    %v215 = vcvt.s32.f32 %v214
    %v216 = vlaneseq
    %v217 = vshrl.u32 %v216, 7
    %v218 = vsub.s32 0, %v217
    %v219 = vrot.slane %v215, %v218
    %v220 = vmul.f32 %v209, %v219
    %v221 = vmul.f32 %v210, %v219
    %v222 = vadd.f32 %v220, %v221
    %223 = vadd.xlane.f32.xlu0 %v222
    %v224 = vpop.xlane.xlu0 %223
    %v225 = vmul.f32 %v220, %v220
    %v226 = vmul.f32 %v221, %v221
    %v227 = vadd.f32 %v225, %v226
    %228 = vadd.xlane.f32.xlu0 %v227
    %v229 = vpop.xlane.xlu0 %228
    %v230 = vmul.f32 %v224, 0.03125
    %v231 = vmul.f32 %v229, 0.03125
    %v232 = vmul.f32 %v230, %v230
    %v233 = vsub.f32 %v231, %v232
    %v234 = vmax.f32 %v233, 0.0
    %v235 = vadd.f32 %v234, 1e-05
    %v236 = vrsqrt.pop %v235
    %v237 = vld [vmem:[%s2] sm:$0xff]
    %v238 = vmul.f32 %v237, %v236
    %v239 = vmul.f32 %v230, %v238
    %241 = vrot.lane.b32.xlu0 %v239, 1
    %v242 = vpop.permute.xlu0 %241
    %v244 = vsub.f32 %v237, %v242
    %246 = vset.pattern.permute.xlu0 0
    %247 = vperm.xlu0 %246, %v238
    %v248 = vpop.permute.xlu0 %247
    %v250 = vmul.f32 %v209, %v248
    %v251 = vmul.f32 %v210, %v248
    %253 = vset.pattern.permute.xlu0 1
    %254 = vperm.xlu0 %253, %v244
    %v255 = vpop.permute.xlu0 %254
    %v257 = vadd.f32 %v250, %v255
    %v258 = vadd.f32 %v251, %v255
    %v259 = vmax.f32 %v257, 0.0
    %v260 = vmax.f32 %v258, 0.0
    %261 = vst [vmem:[#allocation2] sm:$0xff] %v259
    %s262 = scalar_lea.vmem [#allocation2], 8
    %263 = vst [vmem:[%s262] sm:$0xff] %v260
    // Predicated region
    $region14: #{tpu_custom_call.1} parent=1 // pred_check
      _
    $region15: #{tpu_custom_call.1} parent=1 // pred_check_branch
      %265 = sbr.rel (0) target = $region17
    $region16: #{tpu_custom_call.1} parent=1 // pred_region
      %s267 = ssub.s32 256, 256
      %268 = vsyncadd [#allocation3], %s267
      %s269 = sshll.u32 [#allocation2], 4
      %s270 = int_to_ptr.vmem [resolvable:$true] %s269
      %275 = dma.vmem_to_hbm [thread:$0]  %s270, 256, %s3, [#allocation3], 128, 128, 8
    $region17: #{tpu_custom_call.1} parent=1 // pred_fallthru
      _
    // Predicated region
    $region18: #{tpu_custom_call.1} parent=1 // pred_check
      _
    $region19: #{tpu_custom_call.1} parent=1 // pred_check_branch
      %277 = sbr.rel (0) target = $region21
    $region20: #{tpu_custom_call.1} parent=1 // pred_region
      %278 = dma.done [#allocation3], 256
    $region21: #{tpu_custom_call.1} parent=1 // pred_fallthru
      _
    %279 = vsyncpa [#allocation3], 1

// kernel: tpu_custom_call.1
$region0: #{tpu_custom_call.1}
  #allocation0 [shape = 'u32[]', space=smem, size = 0x4, offset = 0x4, fixed_abs, tag = 'smem constant byte address 0x4 - core index']
  #allocation1 [shape = 'u32[144,128]{1,0:T(1,128)}', space=vmem, size = 0x12000, scoped, tag = 'internal scratch']
  %s0 = inlined_call_operand.vmem [shape: bf16[4,384], index: 0, kind: input, shape index: {}]
  %s1 = inlined_call_operand.vmem [shape: bf16[3,8,4], index: 1, kind: input, shape index: {}]
  %s2 = inlined_call_operand.vmem [shape: f32[8,2], index: 2, kind: input, shape index: {}]
  %s3 = inlined_call_operand.hbm [shape: f32[2,8,128], index: 3, kind: output, shape index: {}]
  %s4 = sld [smem:[#allocation0]]
  $region22: #{tpu_custom_call.1} parent=0
    _
  %s6 = ssub.s32 1, %s4
  %s7 = scalar_select 0, %s6, %s4
  $region1: #{tpu_custom_call.1} parent=0
    #allocation2 [shape = 'u8[8192]{0}', space=vmem, size = 0x2000, scoped, tag = 'output window, operand 0, single buffered']
    #allocation3 [shape = 's32[1]{0}', space=sflag, size = 0x4, scoped, tag = 'scoped memory for tpu_custom_call.1']
    %8 = vsyncpa [#allocation3], 0
    // Predicated region
    $region2: #{tpu_custom_call.1} parent=1 // pred_check
      _
    $region3: #{tpu_custom_call.1} parent=1 // pred_check_branch
      %10 = sbr.rel (0) target = $region5
    $region4: #{tpu_custom_call.1} parent=1 // pred_region
      _
    $region5: #{tpu_custom_call.1} parent=1 // pred_fallthru
      _
    // Predicated region
    $region6: #{tpu_custom_call.1} parent=1 // pred_check
      _
    $region7: #{tpu_custom_call.1} parent=1 // pred_check_branch
      %12 = sbr.rel (0) target = $region9
    $region8: #{tpu_custom_call.1} parent=1 // pred_region
      _
    $region9: #{tpu_custom_call.1} parent=1 // pred_fallthru
      _
    // Predicated region
    $region10: #{tpu_custom_call.1} parent=1 // pred_check
      _
    $region11: #{tpu_custom_call.1} parent=1 // pred_check_branch
      %14 = sbr.rel (0) target = $region13
    $region12: #{tpu_custom_call.1} parent=1 // pred_region
      _
    $region13: #{tpu_custom_call.1} parent=1 // pred_fallthru
      _
    %v16 = vld [vmem:[%s0] sm:$0x3f]
    %v17 = vld [vmem:[%s1] sm:$0xf]
    %s18 = scalar_lea.vmem %s1, 4
    %v19 = vld [vmem:[%s18] sm:$0xf]
    %v21 = vcombine.high %v16, %v16
    %v23 = vunpack.c.l.s4 1983009808
    %v24 = vunpack.c.0.s8 %v23
    %v25 = vlaneseq
    %v26 = vshrl.u32 %v25, 7
    %v27 = vsub.s32 %v24, %v26
    %v28 = vrot.slane %v16, %v27
    %v30 = vunpack.c.l.s4 1983009808
    %v31 = vunpack.c.0.s8 %v30
    %v32 = vlaneseq
    %v33 = vshrl.u32 %v32, 7
    %v34 = vsub.s32 %v31, %v33
    %v35 = vrot.slane %v21, %v34
    %v36 = vcombine.high %v28, %v28
    %37 = vrot.lane.b32.xlu0 %v28, 127
    %v38 = vpop.permute.xlu0 %37
    %39 = vrot.lane.b32.xlu0 %v36, 127
    %v40 = vpop.permute.xlu0 %39
    %41 = vrot.lane.b32.xlu0 %v35, 127
    %v42 = vpop.permute.xlu0 %41
    %vm43 = vcmask 1039360
    %v44 = vsel %vm43, %v38, %v40
    %v45 = vsel %vm43, %v40, %v42
    %vm46 = vcmask 31744
    %v48 = vsel %vm46, %v19, 0
    %vm50 = vcmask 1041408
    %v52 = vsel %vm50, %v44, 0
    %v55 = vsel %vm50, %v45, 0
    %57 = vmatprep.subr.bf16.mxu0 0
    %58 = vmatpush1.bf16.msra.mxu0 0
    %59 = vmatprep.subr.bf16.mxu0 0
    %60 = vmatpush1.bf16.msra.mxu0 0
    %61 = vmatprep.subr.bf16.mxu0 0
    %62 = vmatpush1.bf16.msra.mxu0 0
    %63 = vmatprep.subr.bf16.mxu0 0
    %64 = vmatpush1.bf16.msra.mxu0 0
    %65 = vmatprep.subr.bf16.mxu0 0
    %66 = vmatpush1.bf16.msra.mxu0 0
    %67 = vmatprep.subr.bf16.mxu0 0
    %68 = vmatpush1.bf16.msra.mxu0 0
    %69 = vmatprep.subr.bf16.mxu0 0
    %70 = vmatpush1.bf16.msra.mxu0 0
    %71 = vmatprep.subr.bf16.mxu0 %v55
    %72 = vmatpush1.bf16.msra.mxu0 %v52
    %73 = vmatprep.subr.bf16.mxu0 0
    %74 = vmatpush2.bf16.msra.mxu0 0
    %75 = vmatprep.subr.bf16.mxu0 0
    %76 = vmatpush2.bf16.msra.mxu0 0
    %77 = vmatprep.subr.bf16.mxu0 0
    %78 = vmatpush2.bf16.msra.mxu0 0
    %79 = vmatprep.subr.bf16.mxu0 0
    %80 = vmatpush2.bf16.msra.mxu0 0
    %81 = vmatprep.subr.bf16.mxu0 0
    %82 = vmatpush2.bf16.msra.mxu0 0
    %83 = vmatprep.subr.bf16.mxu0 0
    %84 = vmatpush2.bf16.msra.mxu0 0
    %85 = vmatprep.subr.bf16.mxu0 0
    %86 = vmatpush2.bf16.msra.mxu0 0
    %87 = vmatprep.subr.bf16.mxu0 0
    %88 = vmatpush2.bf16.msra.mxu0 0
    %89 = vmatprep.mubr.bf16.mxu0 0
    %90 = vmatmul.mubr.bf16.gmra.mxu0 %v48
    %v91 = vpop.f32.mrf.mxu0
    %v92 = vadd.f32 0.0, %v91
    %v93 = vpop.f32.mrf.mxu0
    %v94 = vadd.f32 0.0, %v93
    %v95 = vpop.f32.mrf.mxu0
    %v96 = vpop.f32.mrf.mxu0
    %97 = vdwg.mxu0
    %v99 = vsel %vm46, %v17, 0
    %v102 = vsel %vm50, %v28, 0
    %v105 = vsel %vm50, %v36, 0
    %107 = vmatprep.subr.bf16.mxu0 0
    %108 = vmatpush1.bf16.msra.mxu0 0
    %109 = vmatprep.subr.bf16.mxu0 0
    %110 = vmatpush1.bf16.msra.mxu0 0
    %111 = vmatprep.subr.bf16.mxu0 0
    %112 = vmatpush1.bf16.msra.mxu0 0
    %113 = vmatprep.subr.bf16.mxu0 0
    %114 = vmatpush1.bf16.msra.mxu0 0
    %115 = vmatprep.subr.bf16.mxu0 0
    %116 = vmatpush1.bf16.msra.mxu0 0
    %117 = vmatprep.subr.bf16.mxu0 0
    %118 = vmatpush1.bf16.msra.mxu0 0
    %119 = vmatprep.subr.bf16.mxu0 0
    %120 = vmatpush1.bf16.msra.mxu0 0
    %121 = vmatprep.subr.bf16.mxu0 %v105
    %122 = vmatpush1.bf16.msra.mxu0 %v102
    %123 = vmatprep.subr.bf16.mxu0 0
    %124 = vmatpush2.bf16.msra.mxu0 0
    %125 = vmatprep.subr.bf16.mxu0 0
    %126 = vmatpush2.bf16.msra.mxu0 0
    %127 = vmatprep.subr.bf16.mxu0 0
    %128 = vmatpush2.bf16.msra.mxu0 0
    %129 = vmatprep.subr.bf16.mxu0 0
    %130 = vmatpush2.bf16.msra.mxu0 0
    %131 = vmatprep.subr.bf16.mxu0 0
    %132 = vmatpush2.bf16.msra.mxu0 0
    %133 = vmatprep.subr.bf16.mxu0 0
    %134 = vmatpush2.bf16.msra.mxu0 0
    %135 = vmatprep.subr.bf16.mxu0 0
    %136 = vmatpush2.bf16.msra.mxu0 0
    %137 = vmatprep.subr.bf16.mxu0 0
    %138 = vmatpush2.bf16.msra.mxu0 0
    %139 = vmatprep.mubr.bf16.mxu0 0
    %140 = vmatmul.mubr.bf16.gmra.mxu0 %v99
    %v141 = vpop.f32.mrf.mxu0
    %v142 = vadd.f32 %v92, %v141
    %v143 = vpop.f32.mrf.mxu0
    %v144 = vadd.f32 %v94, %v143
    %v145 = vpop.f32.mrf.mxu0
    %v146 = vpop.f32.mrf.mxu0
    %147 = vdwg.mxu0
    %s148 = scalar_lea.vmem %s1, 8
    %v149 = vld [vmem:[%s148] sm:$0xf]
    %150 = vrot.lane.b32.xlu0 %v28, 126
    %v151 = vpop.permute.xlu0 %150
    %152 = vrot.lane.b32.xlu0 %v36, 126
    %v153 = vpop.permute.xlu0 %152
    %154 = vrot.lane.b32.xlu0 %v35, 126
    %v155 = vpop.permute.xlu0 %154
    %vm156 = vcmask 1031168
    %v157 = vsel %vm156, %v151, %v153
    %v158 = vsel %vm156, %v153, %v155
    %v160 = vsel %vm46, %v149, 0
    %v163 = vsel %vm50, %v157, 0
    %v166 = vsel %vm50, %v158, 0
    %168 = vmatprep.subr.bf16.mxu0 0
    %169 = vmatpush1.bf16.msra.mxu0 0
    %170 = vmatprep.subr.bf16.mxu0 0
    %171 = vmatpush1.bf16.msra.mxu0 0
    %172 = vmatprep.subr.bf16.mxu0 0
    %173 = vmatpush1.bf16.msra.mxu0 0
    %174 = vmatprep.subr.bf16.mxu0 0
    %175 = vmatpush1.bf16.msra.mxu0 0
    %176 = vmatprep.subr.bf16.mxu0 0
    %177 = vmatpush1.bf16.msra.mxu0 0
    %178 = vmatprep.subr.bf16.mxu0 0
    %179 = vmatpush1.bf16.msra.mxu0 0
    %180 = vmatprep.subr.bf16.mxu0 0
    %181 = vmatpush1.bf16.msra.mxu0 0
    %182 = vmatprep.subr.bf16.mxu0 %v166
    %183 = vmatpush1.bf16.msra.mxu0 %v163
    %184 = vmatprep.subr.bf16.mxu0 0
    %185 = vmatpush2.bf16.msra.mxu0 0
    %186 = vmatprep.subr.bf16.mxu0 0
    %187 = vmatpush2.bf16.msra.mxu0 0
    %188 = vmatprep.subr.bf16.mxu0 0
    %189 = vmatpush2.bf16.msra.mxu0 0
    %190 = vmatprep.subr.bf16.mxu0 0
    %191 = vmatpush2.bf16.msra.mxu0 0
    %192 = vmatprep.subr.bf16.mxu0 0
    %193 = vmatpush2.bf16.msra.mxu0 0
    %194 = vmatprep.subr.bf16.mxu0 0
    %195 = vmatpush2.bf16.msra.mxu0 0
    %196 = vmatprep.subr.bf16.mxu0 0
    %197 = vmatpush2.bf16.msra.mxu0 0
    %198 = vmatprep.subr.bf16.mxu0 0
    %199 = vmatpush2.bf16.msra.mxu0 0
    %200 = vmatprep.mubr.bf16.mxu0 0
    %201 = vmatmul.mubr.bf16.gmra.mxu0 %v160
    %v202 = vpop.f32.mrf.mxu0
    %v203 = vadd.f32 0.0, %v202
    %v204 = vpop.f32.mrf.mxu0
    %v205 = vadd.f32 0.0, %v204
    %v206 = vpop.f32.mrf.mxu0
    %v207 = vpop.f32.mrf.mxu0
    %208 = vdwg.mxu0
    %v209 = vadd.f32 %v142, %v203
    %v210 = vadd.f32 %v144, %v205
    %v211 = vlaneseq
    %v212 = vand.u32 %v211, 127
    %vm213 = vcmp.lt.s32.totalorder %v212, 16
    %v214 = vsel %vm213, 1, 0
    %v215 = vcvt.s32.f32 %v214
    %v216 = vlaneseq
    %v217 = vshrl.u32 %v216, 7
    %v218 = vsub.s32 0, %v217
    %v219 = vrot.slane %v215, %v218
    %v220 = vmul.f32 %v209, %v219
    %v221 = vmul.f32 %v210, %v219
    %v222 = vadd.f32 %v220, %v221
    %223 = vadd.xlane.f32.xlu0 %v222
    %v224 = vpop.xlane.xlu0 %223
    %v225 = vmul.f32 %v220, %v220
    %v226 = vmul.f32 %v221, %v221
    %v227 = vadd.f32 %v225, %v226
    %228 = vadd.xlane.f32.xlu0 %v227
    %v229 = vpop.xlane.xlu0 %228
    %v230 = vmul.f32 %v224, 0.03125
    %v231 = vmul.f32 %v229, 0.03125
    %v232 = vmul.f32 %v230, %v230
    %v233 = vsub.f32 %v231, %v232
    %v234 = vmax.f32 %v233, 0.0
    %v235 = vadd.f32 %v234, 1e-05
    %v236 = vrsqrt.pop %v235
    %v237 = vld [vmem:[%s2] sm:$0xff]
    %v238 = vmul.f32 %v237, %v236
    %v239 = vmul.f32 %v230, %v238
    %241 = vrot.lane.b32.xlu0 %v239, 1
    %v242 = vpop.permute.xlu0 %241
    %v244 = vsub.f32 %v237, %v242
    %246 = vset.pattern.permute.xlu0 0
    %247 = vperm.xlu0 %246, %v238
    %v248 = vpop.permute.xlu0 %247
    %v250 = vmul.f32 %v209, %v248
    %v251 = vmul.f32 %v210, %v248
    %253 = vset.pattern.permute.xlu0 1
    %254 = vperm.xlu0 %253, %v244
    %v255 = vpop.permute.xlu0 %254
    %v257 = vadd.f32 %v250, %v255
    %v258 = vadd.f32 %v251, %v255
    %v259 = vmax.f32 %v257, 0.0
    %v260 = vmax.f32 %v258, 0.0
    %261 = vst [vmem:[#allocation2] sm:$0xff] %v259
    %s262 = scalar_lea.vmem [#allocation2], 8
    %263 = vst [vmem:[%s262] sm:$0xff] %v260
    // Predicated region
    $region14: #{tpu_custom_call.1} parent=1 // pred_check
      _
    $region15: #{tpu_custom_call.1} parent=1 // pred_check_branch
      %265 = sbr.rel (0) target = $region17
    $region16: #{tpu_custom_call.1} parent=1 // pred_region
      %s267 = ssub.s32 256, 256
      %268 = vsyncadd [#allocation3], %s267
      %s269 = sshll.u32 [#allocation2], 4
      %s270 = int_to_ptr.vmem [resolvable:$true] %s269
      %275 = dma.vmem_to_hbm [thread:$0]  %s270, 256, %s3, [#allocation3], 128, 128, 8
    $region17: #{tpu_custom_call.1} parent=1 // pred_fallthru
      _
    // Predicated region
    $region18: #{tpu_custom_call.1} parent=1 // pred_check
      _
    $region19: #{tpu_custom_call.1} parent=1 // pred_check_branch
      %277 = sbr.rel (0) target = $region21
    $region20: #{tpu_custom_call.1} parent=1 // pred_region
      %278 = dma.done [#allocation3], 256
    $region21: #{tpu_custom_call.1} parent=1 // pred_fallthru
      _
    %279 = vsyncpa [#allocation3], 1

</llo_original>
